<compile_context>
chip_gen: v7x
topology: tpu7x:2x2x1
jax: 0.10.0
libtpu: 0.0.40
codegen_flags: <defaults>
</compile_context>

<pallas_src>
import jax
import jax.numpy as jnp
from jax.experimental import pallas as pl
from jax.experimental.pallas import tpu as pltpu


# ----------------------------- Pallas kernel --------------------------------

def _backsub_kernel(lb_ref, ub_ref, wlb_ref, wub_ref, nlb_ref, nub_ref):
    k = pl.program_id(2)

    @pl.when(k == 0)
    def _():
        nlb_ref[...] = jnp.zeros_like(nlb_ref)
        nub_ref[...] = jnp.zeros_like(nub_ref)

    lb = lb_ref[...]
    ub = ub_ref[...]

    lb_pos = jnp.maximum(lb, 0.0)      # relu(lb)
    ub_pos = jnp.maximum(ub, 0.0)      # relu(ub)
    lb_neg = lb_pos - lb               # relu(-lb) == relu(lb) - lb
    ub_neg = ub_pos - ub               # relu(-ub) == relu(ub) - ub

    tm = lb.shape[0]

    # Fuse 4 matmuls into 2: each weight tile goes through the MXU once.
    a_lhs = jnp.concatenate([lb_pos, ub_neg], axis=0)   # (2*tm, tk) @ W_lb
    b_lhs = jnp.concatenate([ub_pos, lb_neg], axis=0)   # (2*tm, tk) @ W_ub
    a = jnp.dot(a_lhs, wlb_ref[...], preferred_element_type=jnp.float32)
    b = jnp.dot(b_lhs, wub_ref[...], preferred_element_type=jnp.float32)

    # new_lb = relu(lb)@W_lb - relu(-lb)@W_ub
    # new_ub = relu(ub)@W_ub - relu(-ub)@W_lb
    nlb_ref[...] += a[:tm] - b[tm:]
    nub_ref[...] += b[:tm] - a[tm:]


def _round_up(x, m):
    return ((x + m - 1) // m) * m


def backsub_pallas(lb, ub, w_backsub_lb, w_backsub_ub, *,
                   max_tm=256, max_tn=512, max_tk=512):
    """new_lb, new_ub = backsub(lb, ub, W_lb, W_ub) with a tiled Pallas kernel.

    lb, ub : (M, P)   symbolic bounds (P = out_features + 1)
    W_*    : (P, Q)   backsub matrices (Q = in_features + 1)
    """
    M, P = lb.shape
    Pw, Q = w_backsub_lb.shape
    assert ub.shape == (M, P) and Pw == P and w_backsub_ub.shape == (P, Q)

    f32 = jnp.float32
    lb = lb.astype(f32)
    ub = ub.astype(f32)
    w_lb = w_backsub_lb.astype(f32)
    w_ub = w_backsub_ub.astype(f32)

    # Tile sizes: (8,128)-aligned, capped so the double-buffered working set
    # stays small relative to VMEM on all of v5e / v6e / v7x.
    tm = min(_round_up(M, 8), max_tm)
    tk = min(_round_up(P, 128), max_tk)
    tn = min(_round_up(Q, 128), max_tn)
    Mp, Pp, Qp = _round_up(M, tm), _round_up(P, tk), _round_up(Q, tn)

    # Zero padding: padded rows/cols contribute 0 to the matmuls (relu(0)=0,
    # padded weight rows are 0), and padded output rows/cols are sliced off.
    lb_p = jnp.pad(lb, ((0, Mp - M), (0, Pp - P)))
    ub_p = jnp.pad(ub, ((0, Mp - M), (0, Pp - P)))
    wlb_p = jnp.pad(w_lb, ((0, Pp - P), (0, Qp - Q)))
    wub_p = jnp.pad(w_ub, ((0, Pp - P), (0, Qp - Q)))

    grid = (Mp // tm, Qp // tn, Pp // tk)   # reduction axis (P) last

    out_shape = (jax.ShapeDtypeStruct((Mp, Qp), f32),
                 jax.ShapeDtypeStruct((Mp, Qp), f32))

    new_lb_p, new_ub_p = pl.pallas_call(
        _backsub_kernel,
        out_shape=out_shape,
        grid_spec=pltpu.PrefetchScalarGridSpec(
            num_scalar_prefetch=0,
            grid=grid,
            in_specs=[
                pl.BlockSpec((tm, tk), lambda i, j, k: (i, k)),   # lb
                pl.BlockSpec((tm, tk), lambda i, j, k: (i, k)),   # ub
                pl.BlockSpec((tk, tn), lambda i, j, k: (k, j)),   # W_lb
                pl.BlockSpec((tk, tn), lambda i, j, k: (k, j)),   # W_ub
            ],
            out_specs=(
                pl.BlockSpec((tm, tn), lambda i, j, k: (i, j)),   # new_lb (resident acc)
                pl.BlockSpec((tm, tn), lambda i, j, k: (i, j)),   # new_ub (resident acc)
            ),
        ),
        compiler_params=pltpu.CompilerParams(
            dimension_semantics=("parallel", "parallel", "arbitrary"),
            vmem_limit_bytes=48 << 20,
        ),
    )(lb_p, ub_p, wlb_p, wub_p)

    return new_lb_p[:M, :Q], new_ub_p[:M, :Q]


# ------------------------ parameter / matrix setup (glue) -------------------

def calculate_toeplitz(kernel, input_size, stride, padding):
    """Dense (out_features, in_features) matrix equivalent to the Conv2d layer,
    obtained by pushing the identity basis through lax.conv (setup-only)."""
    c_in, h, w = input_size
    in_features = c_in * h * w
    basis = jnp.eye(in_features, dtype=kernel.dtype).reshape(in_features, c_in, h, w)
    out = jax.lax.conv_general_dilated(
        basis, kernel,
        window_strides=(stride, stride),
        padding=[(padding, padding), (padding, padding)],
        dimension_numbers=("NCHW", "OIHW", "NCHW"))
    c_out, h_out, w_out = out.shape[1], out.shape[2], out.shape[3]
    weight = out.reshape(in_features, c_out * h_out * w_out).T
    return weight, (c_out, h_out, w_out)


def construct_backsub_matrix(weight, bias):
    """JAX equivalent of the PyTorch construct_backsub_matrix."""
    weight_cat_bias_lb = jnp.concatenate([weight, bias[:, None]], axis=1)
    weight_cat_bias_ub = weight_cat_bias_lb
    row = jnp.zeros((1, weight_cat_bias_lb.shape[1]),
                    weight_cat_bias_lb.dtype).at[0, -1].set(1.0)
    weight_cat_bias_backsub_lb = jnp.concatenate([weight_cat_bias_lb, row], axis=0)
    weight_cat_bias_backsub_ub = weight_cat_bias_backsub_lb
    return (weight_cat_bias_backsub_lb, weight_cat_bias_backsub_ub,
            weight_cat_bias_lb, weight_cat_bias_ub)


class Conv2dTransformerPallas:
    """JAX / Pallas port of Conv2dTransformer (forward = backsub)."""

    def __init__(self, conv_kernel, conv_bias, input_size, stride=1, padding=1):
        self.weight, out_size = calculate_toeplitz(conv_kernel, input_size, stride, padding)
        _, out_h, out_w = out_size
        self.bias = jnp.repeat(conv_bias, out_h * out_w)   # torch.repeat_interleave
        (self.weight_cat_bias_backsub_lb,
         self.weight_cat_bias_backsub_ub,
         self.weight_cat_bias_lb,
         self.weight_cat_bias_ub) = construct_backsub_matrix(self.weight, self.bias)
        self._backsub = jax.jit(backsub_pallas)

    def forward(self, lb, ub):
        return self._backsub(lb, ub,
                             self.weight_cat_bias_backsub_lb,
                             self.weight_cat_bias_backsub_ub)

    def get_initial_backsub_matrices(self):
        return self.weight_cat_bias_lb, self.weight_cat_bias_ub

    # TODO(synk): create_backsub_matrices is a no-op (pass) in the original module.
    def create_backsub_matrices(self, lb, ub, first_iteration=True):
        pass


# ---------------------------------- main ------------------------------------

if __name__ == "__main__":
    key = jax.random.PRNGKey(0)
    k_kernel, k_bias, k_lb, k_gap = jax.random.split(key, 4)

    # Small Conv2d: 3 -> 5 channels, 3x3 kernel, stride 1, pad 1, 8x8 inputs.
    c_in, c_out, hw, ksz = 3, 5, 8, 3
    conv_kernel = 0.1 * jax.random.normal(k_kernel, (c_out, c_in, ksz, ksz), jnp.float32)
    conv_bias = 0.1 * jax.random.normal(k_bias, (c_out,), jnp.float32)

    transformer = Conv2dTransformerPallas(conv_kernel, conv_bias,
                                          input_size=(c_in, hw, hw),
                                          stride=1, padding=1)

    out_features = c_out * hw * hw               # 320 -> lb/ub have 321 columns
    M = 8                                        # rows of symbolic expressions
    lb = jax.random.normal(k_lb, (M, out_features + 1), jnp.float32)
    ub = lb + jnp.abs(jax.random.normal(k_gap, (M, out_features + 1), jnp.float32))

    new_lb, new_ub = transformer.forward(lb, ub)
    jax.block_until_ready((new_lb, new_ub))

    # Pure-JAX reference of the backsub hot path (same device).
    def ref_backsub(lb_, ub_, wlb, wub):
        lbp, lbn = jnp.maximum(lb_, 0.0), jnp.maximum(-lb_, 0.0)
        ubp, ubn = jnp.maximum(ub_, 0.0), jnp.maximum(-ub_, 0.0)
        return lbp @ wlb - lbn @ wub, ubp @ wub - ubn @ wlb

    ref_lb, ref_ub = ref_backsub(lb, ub,
                                 transformer.weight_cat_bias_backsub_lb,
                                 transformer.weight_cat_bias_backsub_ub)

    assert new_lb.shape == ref_lb.shape and new_ub.shape == ref_ub.shape
    # Modest tolerance: f32 matmuls on the MXU may use reduced-precision passes.
    assert jnp.allclose(new_lb, ref_lb, atol=1e-2, rtol=1e-2)
    assert jnp.allclose(new_ub, ref_ub, atol=1e-2, rtol=1e-2)

    print("KERNEL_OK")
</pallas_src>

<mosaic_0001>
module attributes {stable_mosaic.version = 11 : i64} {
  func.func @_backsub_kernel(%arg0: i32, %arg1: i32, %arg2: i32, %arg3: memref<8x384xf32, #tpu.memory_space<vmem>>, %arg4: memref<8x384xf32, #tpu.memory_space<vmem>>, %arg5: memref<384x256xf32, #tpu.memory_space<vmem>>, %arg6: memref<384x256xf32, #tpu.memory_space<vmem>>, %arg7: memref<8x256xf32, #tpu.memory_space<vmem>>, %arg8: memref<8x256xf32, #tpu.memory_space<vmem>>) attributes {dimension_semantics = [#tpu.dimension_semantics<parallel>, #tpu.dimension_semantics<parallel>, #tpu.dimension_semantics<arbitrary>], iteration_bounds = array<i64: 1, 1, 1>, scalar_prefetch = 0 : i64, scratch_operands = 0 : i64, tpu.core_type = #tpu.core_type<tc>, window_params = [{transform_indices = @transform_0, window_bounds = array<i64: 8, 384>}, {transform_indices = @transform_1, window_bounds = array<i64: 8, 384>}, {transform_indices = @transform_2, window_bounds = array<i64: 384, 256>}, {transform_indices = @transform_3, window_bounds = array<i64: 384, 256>}, {transform_indices = @transform_4, window_bounds = array<i64: 8, 256>}, {transform_indices = @transform_5, window_bounds = array<i64: 8, 256>}]} {
    %c0_i32 = arith.constant 0 : i32
    %0 = arith.cmpi eq, %arg2, %c0_i32 : i32
    %1 = arith.extui %0 : i1 to i32
    %c0_i32_0 = arith.constant 0 : i32
    %2 = arith.cmpi ne, %1, %c0_i32_0 : i32
    scf.if %2 {
      %cst_19 = arith.constant 0.000000e+00 : f32
      %29 = vector.broadcast %cst_19 : f32 to vector<8x256xf32>
      %c0_20 = arith.constant 0 : index
      %c0_21 = arith.constant 0 : index
      %30 = vector.load %arg7[%c0_20, %c0_21] : memref<8x256xf32, #tpu.memory_space<vmem>>, vector<8x256xf32>
      tpu.vector_store %arg7[%c0_20, %c0_21], %29 {strides = array<i32>} : memref<8x256xf32, #tpu.memory_space<vmem>>, vector<8x256xf32>,
      %cst_22 = arith.constant 0.000000e+00 : f32
      %31 = vector.broadcast %cst_22 : f32 to vector<8x256xf32>
      %c0_23 = arith.constant 0 : index
      %c0_24 = arith.constant 0 : index
      %32 = vector.load %arg8[%c0_23, %c0_24] : memref<8x256xf32, #tpu.memory_space<vmem>>, vector<8x256xf32>
      tpu.vector_store %arg8[%c0_23, %c0_24], %31 {strides = array<i32>} : memref<8x256xf32, #tpu.memory_space<vmem>>, vector<8x256xf32>,
    } else {
    }
    %c0 = arith.constant 0 : index
    %c0_1 = arith.constant 0 : index
    %3 = vector.load %arg3[%c0, %c0_1] : memref<8x384xf32, #tpu.memory_space<vmem>>, vector<8x384xf32>
    %c0_2 = arith.constant 0 : index
    %c0_3 = arith.constant 0 : index
    %4 = vector.load %arg4[%c0_2, %c0_3] : memref<8x384xf32, #tpu.memory_space<vmem>>, vector<8x384xf32>
    %cst = arith.constant 0.000000e+00 : f32
    %5 = vector.broadcast %cst : f32 to vector<8x384xf32>
    %6 = arith.maximumf %3, %5 : vector<8x384xf32>
    %cst_4 = arith.constant 0.000000e+00 : f32
    %7 = vector.broadcast %cst_4 : f32 to vector<8x384xf32>
    %8 = arith.maximumf %4, %7 : vector<8x384xf32>
    %9 = arith.subf %6, %3 : vector<8x384xf32>
    %10 = arith.subf %8, %4 : vector<8x384xf32>
    %11 = tpu.concatenate %6, %10 in 0 : vector<8x384xf32>, vector<8x384xf32> -> vector<16x384xf32>
    %12 = tpu.concatenate %8, %9 in 0 : vector<8x384xf32>, vector<8x384xf32> -> vector<16x384xf32>
    %c0_5 = arith.constant 0 : index
    %c0_6 = arith.constant 0 : index
    %13 = vector.load %arg5[%c0_5, %c0_6] : memref<384x256xf32, #tpu.memory_space<vmem>>, vector<384x256xf32>
    %cst_7 = arith.constant dense<0.000000e+00> : vector<16x256xf32>
    %14 = tpu.matmul %11, %13, %cst_7 {dimension_numbers = #tpu.dot_dimension_numbers<[1], [0], [0], [1], [0, 0, 1, 1], [], []>} : vector<16x384xf32>, vector<384x256xf32>, vector<16x256xf32> -> vector<16x256xf32>
    %c0_8 = arith.constant 0 : index
    %c0_9 = arith.constant 0 : index
    %15 = vector.load %arg6[%c0_8, %c0_9] : memref<384x256xf32, #tpu.memory_space<vmem>>, vector<384x256xf32>
    %cst_10 = arith.constant dense<0.000000e+00> : vector<16x256xf32>
    %16 = tpu.matmul %12, %15, %cst_10 {dimension_numbers = #tpu.dot_dimension_numbers<[1], [0], [0], [1], [0, 0, 1, 1], [], []>} : vector<16x384xf32>, vector<384x256xf32>, vector<16x256xf32> -> vector<16x256xf32>
    %c0_11 = arith.constant 0 : index
    %c0_12 = arith.constant 0 : index
    %17 = vector.load %arg7[%c0_11, %c0_12] : memref<8x256xf32, #tpu.memory_space<vmem>>, vector<8x256xf32>
    %18 = vector.extract_strided_slice %14 {offsets = [0, 0], sizes = [8, 256], strides = [1, 1]} : vector<16x256xf32> to vector<8x256xf32>
    %19 = vector.extract_strided_slice %16 {offsets = [8, 0], sizes = [8, 256], strides = [1, 1]} : vector<16x256xf32> to vector<8x256xf32>
    %20 = arith.subf %18, %19 : vector<8x256xf32>
    %21 = arith.addf %17, %20 : vector<8x256xf32>
    %c0_13 = arith.constant 0 : index
    %c0_14 = arith.constant 0 : index
    %22 = vector.load %arg7[%c0_13, %c0_14] : memref<8x256xf32, #tpu.memory_space<vmem>>, vector<8x256xf32>
    tpu.vector_store %arg7[%c0_13, %c0_14], %21 {strides = array<i32>} : memref<8x256xf32, #tpu.memory_space<vmem>>, vector<8x256xf32>,
    %c0_15 = arith.constant 0 : index
    %c0_16 = arith.constant 0 : index
    %23 = vector.load %arg8[%c0_15, %c0_16] : memref<8x256xf32, #tpu.memory_space<vmem>>, vector<8x256xf32>
    %24 = vector.extract_strided_slice %16 {offsets = [0, 0], sizes = [8, 256], strides = [1, 1]} : vector<16x256xf32> to vector<8x256xf32>
    %25 = vector.extract_strided_slice %14 {offsets = [8, 0], sizes = [8, 256], strides = [1, 1]} : vector<16x256xf32> to vector<8x256xf32>
    %26 = arith.subf %24, %25 : vector<8x256xf32>
    %27 = arith.addf %23, %26 : vector<8x256xf32>
    %c0_17 = arith.constant 0 : index
    %c0_18 = arith.constant 0 : index
    %28 = vector.load %arg8[%c0_17, %c0_18] : memref<8x256xf32, #tpu.memory_space<vmem>>, vector<8x256xf32>
    tpu.vector_store %arg8[%c0_17, %c0_18], %27 {strides = array<i32>} : memref<8x256xf32, #tpu.memory_space<vmem>>, vector<8x256xf32>,
    return
  }
  func.func @transform_0(%arg0: i32, %arg1: i32, %arg2: i32) -> (i32, i32) {
    %c0_i32 = arith.constant 0 : i32
    return %arg0, %arg2 : i32, i32
  }
  func.func @transform_1(%arg0: i32, %arg1: i32, %arg2: i32) -> (i32, i32) {
    %c0_i32 = arith.constant 0 : i32
    return %arg0, %arg2 : i32, i32
  }
  func.func @transform_2(%arg0: i32, %arg1: i32, %arg2: i32) -> (i32, i32) {
    %c0_i32 = arith.constant 0 : i32
    return %arg2, %arg1 : i32, i32
  }
  func.func @transform_3(%arg0: i32, %arg1: i32, %arg2: i32) -> (i32, i32) {
    %c0_i32 = arith.constant 0 : i32
    return %arg2, %arg1 : i32, i32
  }
  func.func @transform_4(%arg0: i32, %arg1: i32, %arg2: i32) -> (i32, i32) {
    %c0_i32 = arith.constant 0 : i32
    return %arg0, %arg1 : i32, i32
  }
  func.func @transform_5(%arg0: i32, %arg1: i32, %arg2: i32) -> (i32, i32) {
    %c0_i32 = arith.constant 0 : i32
    return %arg0, %arg1 : i32, i32
  }
}

</mosaic_0001>

<llo_original>
// kernel: backsub_pallas.1
$region0: #{backsub_pallas.1}
  #allocation0 [shape = 'u32[]', space=smem, size = 0x4, offset = 0x4, fixed_abs, tag = 'smem constant byte address 0x4 - core index']
  #allocation1 [shape = 'u32[144,128]{1,0:T(1,128)}', space=vmem, size = 0x12000, scoped, tag = 'internal scratch']
  %s0 = inlined_call_operand.vmem [shape: f32[8,384], index: 0, kind: input, shape index: {}]
  %s1 = inlined_call_operand.vmem [shape: f32[8,384], index: 1, kind: input, shape index: {}]
  %s2 = inlined_call_operand.vmem [shape: f32[384,256], index: 2, kind: input, shape index: {}]
  %s3 = inlined_call_operand.vmem [shape: f32[384,256], index: 3, kind: input, shape index: {}]
  %s4 = inlined_call_operand.hbm [shape: f32[8,256], index: 4, kind: output, shape index: {0}]
  %s5 = inlined_call_operand.hbm [shape: f32[8,256], index: 5, kind: output, shape index: {1}]
  %6 = xla_tuple %s4, %s5
  %s7 = sld [smem:[#allocation0]]
  $region38: #{backsub_pallas.1} parent=0
    _
  %s9 = ssub.s32 1, %s7
  %s10 = scalar_select 0, %s9, %s7
  $region1: #{backsub_pallas.1} parent=0
    #allocation2 [shape = 'u8[8192]{0}', space=vmem, size = 0x2000, scoped, tag = 'output window, operand 0, single buffered']
    #allocation3 [shape = 's32[1]{0}', space=sflag, size = 0x4, scoped, tag = 'scoped memory for backsub_pallas.1']
    #allocation4 [shape = 'u8[8192]{0}', space=vmem, size = 0x2000, scoped, tag = 'output window, operand 1, single buffered']
    #allocation5 [shape = 's32[1]{0}', space=sflag, size = 0x4, scoped, tag = 'scoped memory for backsub_pallas.1']
    %11 = vsyncpa [#allocation3], 0
    %12 = vsyncpa [#allocation5], 0
    // Predicated region
    $region2: #{backsub_pallas.1} parent=1 // pred_check
      _
    $region3: #{backsub_pallas.1} parent=1 // pred_check_branch
      %14 = sbr.rel (0) target = $region5
    $region4: #{backsub_pallas.1} parent=1 // pred_region
      _
    $region5: #{backsub_pallas.1} parent=1 // pred_fallthru
      _
    // Predicated region
    $region6: #{backsub_pallas.1} parent=1 // pred_check
      _
    $region7: #{backsub_pallas.1} parent=1 // pred_check_branch
      %16 = sbr.rel (0) target = $region9
    $region8: #{backsub_pallas.1} parent=1 // pred_region
      _
    $region9: #{backsub_pallas.1} parent=1 // pred_fallthru
      _
    // Predicated region
    $region10: #{backsub_pallas.1} parent=1 // pred_check
      _
    $region11: #{backsub_pallas.1} parent=1 // pred_check_branch
      %18 = sbr.rel (0) target = $region13
    $region12: #{backsub_pallas.1} parent=1 // pred_region
      _
    $region13: #{backsub_pallas.1} parent=1 // pred_fallthru
      _
    // Predicated region
    $region14: #{backsub_pallas.1} parent=1 // pred_check
      _
    $region15: #{backsub_pallas.1} parent=1 // pred_check_branch
      %20 = sbr.rel (0) target = $region17
    $region16: #{backsub_pallas.1} parent=1 // pred_region
      _
    $region17: #{backsub_pallas.1} parent=1 // pred_fallthru
      _
    %p21 = scmp.eq.s32.totalorder 0, 0
    // Predicated region
    $region18: #{backsub_pallas.1} parent=1 // pred_check
      %p22 = pneg %p21
    $region19: #{backsub_pallas.1} parent=1 // pred_check_branch
      %24 = sbr.rel (%p22) target = $region21
    $region20: #{backsub_pallas.1} parent=1 // pred_region
      %25 = vst [vmem:[#allocation2] sm:$0xff] 0.0
      %26 = vst [vmem:[#allocation2 + $0x8] sm:$0xff] 0.0
      %27 = vst [vmem:[#allocation4] sm:$0xff] 0.0
      %28 = vst [vmem:[#allocation4 + $0x8] sm:$0xff] 0.0
    $region21: #{backsub_pallas.1} parent=1 // pred_fallthru
      _
    %v29 = vld [vmem:[%s0] sm:$0xff]
    %v30 = vld [vmem:[%s0 + $0x8] sm:$0xff]
    %v31 = vld [vmem:[%s0 + $0x10] sm:$0xff]
    %v32 = vld [vmem:[%s1] sm:$0xff]
    %v33 = vld [vmem:[%s1 + $0x8] sm:$0xff]
    %v34 = vld [vmem:[%s1 + $0x10] sm:$0xff]
    %v35 = vmax.f32 %v29, 0.0
    %v36 = vmax.f32 %v30, 0.0
    %v37 = vmax.f32 %v31, 0.0
    %v38 = vmax.f32 %v32, 0.0
    %v39 = vmax.f32 %v33, 0.0
    %v40 = vmax.f32 %v34, 0.0
    %v41 = vsub.f32 %v35, %v29
    %v42 = vsub.f32 %v36, %v30
    %v43 = vsub.f32 %v37, %v31
    %v44 = vsub.f32 %v38, %v32
    %v45 = vsub.f32 %v39, %v33
    %v46 = vsub.f32 %v40, %v34
    %v47 = vld [vmem:[%s2] sm:$0xff]
    %v48 = vld [vmem:[%s2 + $0x8] sm:$0xff]
    %v49 = vld [vmem:[%s2 + $0x10] sm:$0xff]
    %v50 = vld [vmem:[%s2 + $0x18] sm:$0xff]
    %v51 = vld [vmem:[%s2 + $0x20] sm:$0xff]
    %v52 = vld [vmem:[%s2 + $0x28] sm:$0xff]
    %v53 = vld [vmem:[%s2 + $0x30] sm:$0xff]
    %v54 = vld [vmem:[%s2 + $0x38] sm:$0xff]
    %v55 = vld [vmem:[%s2 + $0x40] sm:$0xff]
    %v56 = vld [vmem:[%s2 + $0x48] sm:$0xff]
    %v57 = vld [vmem:[%s2 + $0x50] sm:$0xff]
    %v58 = vld [vmem:[%s2 + $0x58] sm:$0xff]
    %v59 = vld [vmem:[%s2 + $0x60] sm:$0xff]
    %v60 = vld [vmem:[%s2 + $0x68] sm:$0xff]
    %v61 = vld [vmem:[%s2 + $0x70] sm:$0xff]
    %v62 = vld [vmem:[%s2 + $0x78] sm:$0xff]
    %v63 = vld [vmem:[%s2 + $0x80] sm:$0xff]
    %v64 = vld [vmem:[%s2 + $0x88] sm:$0xff]
    %v65 = vld [vmem:[%s2 + $0x90] sm:$0xff]
    %v66 = vld [vmem:[%s2 + $0x98] sm:$0xff]
    %v67 = vld [vmem:[%s2 + $0xa0] sm:$0xff]
    %v68 = vld [vmem:[%s2 + $0xa8] sm:$0xff]
    %v69 = vld [vmem:[%s2 + $0xb0] sm:$0xff]
    %v70 = vld [vmem:[%s2 + $0xb8] sm:$0xff]
    %v71 = vld [vmem:[%s2 + $0xc0] sm:$0xff]
    %v72 = vld [vmem:[%s2 + $0xc8] sm:$0xff]
    %v73 = vld [vmem:[%s2 + $0xd0] sm:$0xff]
    %v74 = vld [vmem:[%s2 + $0xd8] sm:$0xff]
    %v75 = vld [vmem:[%s2 + $0xe0] sm:$0xff]
    %v76 = vld [vmem:[%s2 + $0xe8] sm:$0xff]
    %v77 = vld [vmem:[%s2 + $0xf0] sm:$0xff]
    %v78 = vld [vmem:[%s2 + $0xf8] sm:$0xff]
    %v79 = vld [vmem:[%s2 + $0x100] sm:$0xff]
    %v80 = vld [vmem:[%s2 + $0x108] sm:$0xff]
    %v81 = vld [vmem:[%s2 + $0x110] sm:$0xff]
    %v82 = vld [vmem:[%s2 + $0x118] sm:$0xff]
    %v83 = vld [vmem:[%s2 + $0x120] sm:$0xff]
    %v84 = vld [vmem:[%s2 + $0x128] sm:$0xff]
    %v85 = vld [vmem:[%s2 + $0x130] sm:$0xff]
    %v86 = vld [vmem:[%s2 + $0x138] sm:$0xff]
    %v87 = vld [vmem:[%s2 + $0x140] sm:$0xff]
    %v88 = vld [vmem:[%s2 + $0x148] sm:$0xff]
    %v89 = vld [vmem:[%s2 + $0x150] sm:$0xff]
    %v90 = vld [vmem:[%s2 + $0x158] sm:$0xff]
    %v91 = vld [vmem:[%s2 + $0x160] sm:$0xff]
    %v92 = vld [vmem:[%s2 + $0x168] sm:$0xff]
    %v93 = vld [vmem:[%s2 + $0x170] sm:$0xff]
    %v94 = vld [vmem:[%s2 + $0x178] sm:$0xff]
    %v95 = vld [vmem:[%s2 + $0x180] sm:$0xff]
    %v96 = vld [vmem:[%s2 + $0x188] sm:$0xff]
    %v97 = vld [vmem:[%s2 + $0x190] sm:$0xff]
    %v98 = vld [vmem:[%s2 + $0x198] sm:$0xff]
    %v99 = vld [vmem:[%s2 + $0x1a0] sm:$0xff]
    %v100 = vld [vmem:[%s2 + $0x1a8] sm:$0xff]
    %v101 = vld [vmem:[%s2 + $0x1b0] sm:$0xff]
    %v102 = vld [vmem:[%s2 + $0x1b8] sm:$0xff]
    %v103 = vld [vmem:[%s2 + $0x1c0] sm:$0xff]
    %v104 = vld [vmem:[%s2 + $0x1c8] sm:$0xff]
    %v105 = vld [vmem:[%s2 + $0x1d0] sm:$0xff]
    %v106 = vld [vmem:[%s2 + $0x1d8] sm:$0xff]
    %v107 = vld [vmem:[%s2 + $0x1e0] sm:$0xff]
    %v108 = vld [vmem:[%s2 + $0x1e8] sm:$0xff]
    %v109 = vld [vmem:[%s2 + $0x1f0] sm:$0xff]
    %v110 = vld [vmem:[%s2 + $0x1f8] sm:$0xff]
    %v111 = vld [vmem:[%s2 + $0x200] sm:$0xff]
    %v112 = vld [vmem:[%s2 + $0x208] sm:$0xff]
    %v113 = vld [vmem:[%s2 + $0x210] sm:$0xff]
    %v114 = vld [vmem:[%s2 + $0x218] sm:$0xff]
    %v115 = vld [vmem:[%s2 + $0x220] sm:$0xff]
    %v116 = vld [vmem:[%s2 + $0x228] sm:$0xff]
    %v117 = vld [vmem:[%s2 + $0x230] sm:$0xff]
    %v118 = vld [vmem:[%s2 + $0x238] sm:$0xff]
    %v119 = vld [vmem:[%s2 + $0x240] sm:$0xff]
    %v120 = vld [vmem:[%s2 + $0x248] sm:$0xff]
    %v121 = vld [vmem:[%s2 + $0x250] sm:$0xff]
    %v122 = vld [vmem:[%s2 + $0x258] sm:$0xff]
    %v123 = vld [vmem:[%s2 + $0x260] sm:$0xff]
    %v124 = vld [vmem:[%s2 + $0x268] sm:$0xff]
    %v125 = vld [vmem:[%s2 + $0x270] sm:$0xff]
    %v126 = vld [vmem:[%s2 + $0x278] sm:$0xff]
    %v127 = vld [vmem:[%s2 + $0x280] sm:$0xff]
    %v128 = vld [vmem:[%s2 + $0x288] sm:$0xff]
    %v129 = vld [vmem:[%s2 + $0x290] sm:$0xff]
    %v130 = vld [vmem:[%s2 + $0x298] sm:$0xff]
    %v131 = vld [vmem:[%s2 + $0x2a0] sm:$0xff]
    %v132 = vld [vmem:[%s2 + $0x2a8] sm:$0xff]
    %v133 = vld [vmem:[%s2 + $0x2b0] sm:$0xff]
    %v134 = vld [vmem:[%s2 + $0x2b8] sm:$0xff]
    %v135 = vld [vmem:[%s2 + $0x2c0] sm:$0xff]
    %v136 = vld [vmem:[%s2 + $0x2c8] sm:$0xff]
    %v137 = vld [vmem:[%s2 + $0x2d0] sm:$0xff]
    %v138 = vld [vmem:[%s2 + $0x2d8] sm:$0xff]
    %v139 = vld [vmem:[%s2 + $0x2e0] sm:$0xff]
    %v140 = vld [vmem:[%s2 + $0x2e8] sm:$0xff]
    %v141 = vld [vmem:[%s2 + $0x2f0] sm:$0xff]
    %v142 = vld [vmem:[%s2 + $0x2f8] sm:$0xff]
    %143 = vmatprep.subr.mxu0 %v48
    %144 = vmatpush1.msra.mxu0 %v47
    %145 = vmatprep.subr.mxu0 %v50
    %146 = vmatpush1.msra.mxu0 %v49
    %147 = vmatprep.subr.mxu0 %v52
    %148 = vmatpush1.msra.mxu0 %v51
    %149 = vmatprep.subr.mxu0 %v54
    %150 = vmatpush1.msra.mxu0 %v53
    %151 = vmatprep.subr.mxu0 %v56
    %152 = vmatpush1.msra.mxu0 %v55
    %153 = vmatprep.subr.mxu0 %v58
    %154 = vmatpush1.msra.mxu0 %v57
    %155 = vmatprep.subr.mxu0 %v60
    %156 = vmatpush1.msra.mxu0 %v59
    %157 = vmatprep.subr.mxu0 %v62
    %158 = vmatpush1.msra.mxu0 %v61
    %159 = vmatprep.subr.mxu0 %v64
    %160 = vmatpush1.msra.mxu0 %v63
    %161 = vmatprep.subr.mxu0 %v66
    %162 = vmatpush1.msra.mxu0 %v65
    %163 = vmatprep.subr.mxu0 %v68
    %164 = vmatpush1.msra.mxu0 %v67
    %165 = vmatprep.subr.mxu0 %v70
    %166 = vmatpush1.msra.mxu0 %v69
    %167 = vmatprep.subr.mxu0 %v72
    %168 = vmatpush1.msra.mxu0 %v71
    %169 = vmatprep.subr.mxu0 %v74
    %170 = vmatpush1.msra.mxu0 %v73
    %171 = vmatprep.subr.mxu0 %v76
    %172 = vmatpush1.msra.mxu0 %v75
    %173 = vmatprep.subr.mxu0 %v78
    %174 = vmatpush1.msra.mxu0 %v77
    %175 = vmatprep.subr.mxu0 %v80
    %176 = vmatpush1.msra.mxu0 %v79
    %177 = vmatprep.subr.mxu0 %v82
    %178 = vmatpush1.msra.mxu0 %v81
    %179 = vmatprep.subr.mxu0 %v84
    %180 = vmatpush1.msra.mxu0 %v83
    %181 = vmatprep.subr.mxu0 %v86
    %182 = vmatpush1.msra.mxu0 %v85
    %183 = vmatprep.subr.mxu0 %v88
    %184 = vmatpush1.msra.mxu0 %v87
    %185 = vmatprep.subr.mxu0 %v90
    %186 = vmatpush1.msra.mxu0 %v89
    %187 = vmatprep.subr.mxu0 %v92
    %188 = vmatpush1.msra.mxu0 %v91
    %189 = vmatprep.subr.mxu0 %v94
    %190 = vmatpush1.msra.mxu0 %v93
    %191 = vmatprep.subr.mxu0 %v96
    %192 = vmatpush1.msra.mxu0 %v95
    %193 = vmatprep.subr.mxu0 %v98
    %194 = vmatpush1.msra.mxu0 %v97
    %195 = vmatprep.subr.mxu0 %v100
    %196 = vmatpush1.msra.mxu0 %v99
    %197 = vmatprep.subr.mxu0 %v102
    %198 = vmatpush1.msra.mxu0 %v101
    %199 = vmatprep.subr.mxu0 %v104
    %200 = vmatpush1.msra.mxu0 %v103
    %201 = vmatprep.subr.mxu0 %v106
    %202 = vmatpush1.msra.mxu0 %v105
    %203 = vmatprep.subr.mxu0 %v108
    %204 = vmatpush1.msra.mxu0 %v107
    %205 = vmatprep.subr.mxu0 %v110
    %206 = vmatpush1.msra.mxu0 %v109
    %207 = vmatprep.mubr.f32.mxu0 %v36
    %208 = vmatmul.mubr.f32.gmra.mrb[0].mxu0 %v35
    %v209 = vpop.f32.mrb[0].mxu0
    %v210 = vadd.f32 0.0, %v209
    %v211 = vpop.f32.mrb[0].mxu0
    %v212 = vadd.f32 0.0, %v211
    %213 = vmatprep.mubr.f32.mxu0 %v45
    %214 = vmatmul.mubr.f32.gmra.mrb[0].mxu0 %v44
    %v215 = vpop.f32.mrb[0].mxu0
    %v216 = vadd.f32 0.0, %v215
    %v217 = vpop.f32.mrb[0].mxu0
    %v218 = vadd.f32 0.0, %v217
    %219 = vdwg.mxu0
    %220 = vmatprep.subr.mxu0 %v112
    %221 = vmatpush1.msra.mxu0 %v111
    %222 = vmatprep.subr.mxu0 %v114
    %223 = vmatpush1.msra.mxu0 %v113
    %224 = vmatprep.subr.mxu0 %v116
    %225 = vmatpush1.msra.mxu0 %v115
    %226 = vmatprep.subr.mxu0 %v118
    %227 = vmatpush1.msra.mxu0 %v117
    %228 = vmatprep.subr.mxu0 %v120
    %229 = vmatpush1.msra.mxu0 %v119
    %230 = vmatprep.subr.mxu0 %v122
    %231 = vmatpush1.msra.mxu0 %v121
    %232 = vmatprep.subr.mxu0 %v124
    %233 = vmatpush1.msra.mxu0 %v123
    %234 = vmatprep.subr.mxu0 %v126
    %235 = vmatpush1.msra.mxu0 %v125
    %236 = vmatprep.subr.mxu0 %v128
    %237 = vmatpush1.msra.mxu0 %v127
    %238 = vmatprep.subr.mxu0 %v130
    %239 = vmatpush1.msra.mxu0 %v129
    %240 = vmatprep.subr.mxu0 %v132
    %241 = vmatpush1.msra.mxu0 %v131
    %242 = vmatprep.subr.mxu0 %v134
    %243 = vmatpush1.msra.mxu0 %v133
    %244 = vmatprep.subr.mxu0 %v136
    %245 = vmatpush1.msra.mxu0 %v135
    %246 = vmatprep.subr.mxu0 %v138
    %247 = vmatpush1.msra.mxu0 %v137
    %248 = vmatprep.subr.mxu0 %v140
    %249 = vmatpush1.msra.mxu0 %v139
    %250 = vmatprep.subr.mxu0 %v142
    %251 = vmatpush1.msra.mxu0 %v141
    %252 = vmatprep.subr.mxu0 0.0
    %253 = vmatpush1.msra.mxu0 0.0
    %254 = vmatprep.subr.mxu0 0.0
    %255 = vmatpush1.msra.mxu0 0.0
    %256 = vmatprep.subr.mxu0 0.0
    %257 = vmatpush1.msra.mxu0 0.0
    %258 = vmatprep.subr.mxu0 0.0
    %259 = vmatpush1.msra.mxu0 0.0
    %260 = vmatprep.subr.mxu0 0.0
    %261 = vmatpush1.msra.mxu0 0.0
    %262 = vmatprep.subr.mxu0 0.0
    %263 = vmatpush1.msra.mxu0 0.0
    %264 = vmatprep.subr.mxu0 0.0
    %265 = vmatpush1.msra.mxu0 0.0
    %266 = vmatprep.subr.mxu0 0.0
    %267 = vmatpush1.msra.mxu0 0.0
    %268 = vmatprep.subr.mxu0 0.0
    %269 = vmatpush1.msra.mxu0 0.0
    %270 = vmatprep.subr.mxu0 0.0
    %271 = vmatpush1.msra.mxu0 0.0
    %272 = vmatprep.subr.mxu0 0.0
    %273 = vmatpush1.msra.mxu0 0.0
    %274 = vmatprep.subr.mxu0 0.0
    %275 = vmatpush1.msra.mxu0 0.0
    %276 = vmatprep.subr.mxu0 0.0
    %277 = vmatpush1.msra.mxu0 0.0
    %278 = vmatprep.subr.mxu0 0.0
    %279 = vmatpush1.msra.mxu0 0.0
    %280 = vmatprep.subr.mxu0 0.0
    %281 = vmatpush1.msra.mxu0 0.0
    %282 = vmatprep.subr.mxu0 0.0
    %283 = vmatpush1.msra.mxu0 0.0
    %284 = vmatprep.mubr.f32.mxu0 0.0
    %285 = vmatmul.mubr.f32.gmra.mrb[0].mxu0 %v37
    %v286 = vpop.f32.mrb[0].mxu0
    %v287 = vadd.f32 %v210, %v286
    %v288 = vpop.f32.mrb[0].mxu0
    %v289 = vadd.f32 %v212, %v288
    %290 = vmatprep.mubr.f32.mxu0 0.0
    %291 = vmatmul.mubr.f32.gmra.mrb[0].mxu0 %v46
    %v292 = vpop.f32.mrb[0].mxu0
    %v293 = vadd.f32 %v216, %v292
    %v294 = vpop.f32.mrb[0].mxu0
    %v295 = vadd.f32 %v218, %v294
    %296 = vdwg.mxu0
    %v297 = vld [vmem:[%s3] sm:$0xff]
    %v298 = vld [vmem:[%s3 + $0x8] sm:$0xff]
    %v299 = vld [vmem:[%s3 + $0x10] sm:$0xff]
    %v300 = vld [vmem:[%s3 + $0x18] sm:$0xff]
    %v301 = vld [vmem:[%s3 + $0x20] sm:$0xff]
    %v302 = vld [vmem:[%s3 + $0x28] sm:$0xff]
    %v303 = vld [vmem:[%s3 + $0x30] sm:$0xff]
    %v304 = vld [vmem:[%s3 + $0x38] sm:$0xff]
    %v305 = vld [vmem:[%s3 + $0x40] sm:$0xff]
    %v306 = vld [vmem:[%s3 + $0x48] sm:$0xff]
    %v307 = vld [vmem:[%s3 + $0x50] sm:$0xff]
    %v308 = vld [vmem:[%s3 + $0x58] sm:$0xff]
    %v309 = vld [vmem:[%s3 + $0x60] sm:$0xff]
    %v310 = vld [vmem:[%s3 + $0x68] sm:$0xff]
    %v311 = vld [vmem:[%s3 + $0x70] sm:$0xff]
    %v312 = vld [vmem:[%s3 + $0x78] sm:$0xff]
    %v313 = vld [vmem:[%s3 + $0x80] sm:$0xff]
    %v314 = vld [vmem:[%s3 + $0x88] sm:$0xff]
    %v315 = vld [vmem:[%s3 + $0x90] sm:$0xff]
    %v316 = vld [vmem:[%s3 + $0x98] sm:$0xff]
    %v317 = vld [vmem:[%s3 + $0xa0] sm:$0xff]
    %v318 = vld [vmem:[%s3 + $0xa8] sm:$0xff]
    %v319 = vld [vmem:[%s3 + $0xb0] sm:$0xff]
    %v320 = vld [vmem:[%s3 + $0xb8] sm:$0xff]
    %v321 = vld [vmem:[%s3 + $0xc0] sm:$0xff]
    %v322 = vld [vmem:[%s3 + $0xc8] sm:$0xff]
    %v323 = vld [vmem:[%s3 + $0xd0] sm:$0xff]
    %v324 = vld [vmem:[%s3 + $0xd8] sm:$0xff]
    %v325 = vld [vmem:[%s3 + $0xe0] sm:$0xff]
    %v326 = vld [vmem:[%s3 + $0xe8] sm:$0xff]
    %v327 = vld [vmem:[%s3 + $0xf0] sm:$0xff]
    %v328 = vld [vmem:[%s3 + $0xf8] sm:$0xff]
    %v329 = vld [vmem:[%s3 + $0x100] sm:$0xff]
    %v330 = vld [vmem:[%s3 + $0x108] sm:$0xff]
    %v331 = vld [vmem:[%s3 + $0x110] sm:$0xff]
    %v332 = vld [vmem:[%s3 + $0x118] sm:$0xff]
    %v333 = vld [vmem:[%s3 + $0x120] sm:$0xff]
    %v334 = vld [vmem:[%s3 + $0x128] sm:$0xff]
    %v335 = vld [vmem:[%s3 + $0x130] sm:$0xff]
    %v336 = vld [vmem:[%s3 + $0x138] sm:$0xff]
    %v337 = vld [vmem:[%s3 + $0x140] sm:$0xff]
    %v338 = vld [vmem:[%s3 + $0x148] sm:$0xff]
    %v339 = vld [vmem:[%s3 + $0x150] sm:$0xff]
    %v340 = vld [vmem:[%s3 + $0x158] sm:$0xff]
    %v341 = vld [vmem:[%s3 + $0x160] sm:$0xff]
    %v342 = vld [vmem:[%s3 + $0x168] sm:$0xff]
    %v343 = vld [vmem:[%s3 + $0x170] sm:$0xff]
    %v344 = vld [vmem:[%s3 + $0x178] sm:$0xff]
    %v345 = vld [vmem:[%s3 + $0x180] sm:$0xff]
    %v346 = vld [vmem:[%s3 + $0x188] sm:$0xff]
    %v347 = vld [vmem:[%s3 + $0x190] sm:$0xff]
    %v348 = vld [vmem:[%s3 + $0x198] sm:$0xff]
    %v349 = vld [vmem:[%s3 + $0x1a0] sm:$0xff]
    %v350 = vld [vmem:[%s3 + $0x1a8] sm:$0xff]
    %v351 = vld [vmem:[%s3 + $0x1b0] sm:$0xff]
    %v352 = vld [vmem:[%s3 + $0x1b8] sm:$0xff]
    %v353 = vld [vmem:[%s3 + $0x1c0] sm:$0xff]
    %v354 = vld [vmem:[%s3 + $0x1c8] sm:$0xff]
    %v355 = vld [vmem:[%s3 + $0x1d0] sm:$0xff]
    %v356 = vld [vmem:[%s3 + $0x1d8] sm:$0xff]
    %v357 = vld [vmem:[%s3 + $0x1e0] sm:$0xff]
    %v358 = vld [vmem:[%s3 + $0x1e8] sm:$0xff]
    %v359 = vld [vmem:[%s3 + $0x1f0] sm:$0xff]
    %v360 = vld [vmem:[%s3 + $0x1f8] sm:$0xff]
    %v361 = vld [vmem:[%s3 + $0x200] sm:$0xff]
    %v362 = vld [vmem:[%s3 + $0x208] sm:$0xff]
    %v363 = vld [vmem:[%s3 + $0x210] sm:$0xff]
    %v364 = vld [vmem:[%s3 + $0x218] sm:$0xff]
    %v365 = vld [vmem:[%s3 + $0x220] sm:$0xff]
    %v366 = vld [vmem:[%s3 + $0x228] sm:$0xff]
    %v367 = vld [vmem:[%s3 + $0x230] sm:$0xff]
    %v368 = vld [vmem:[%s3 + $0x238] sm:$0xff]
    %v369 = vld [vmem:[%s3 + $0x240] sm:$0xff]
    %v370 = vld [vmem:[%s3 + $0x248] sm:$0xff]
    %v371 = vld [vmem:[%s3 + $0x250] sm:$0xff]
    %v372 = vld [vmem:[%s3 + $0x258] sm:$0xff]
    %v373 = vld [vmem:[%s3 + $0x260] sm:$0xff]
    %v374 = vld [vmem:[%s3 + $0x268] sm:$0xff]
    %v375 = vld [vmem:[%s3 + $0x270] sm:$0xff]
    %v376 = vld [vmem:[%s3 + $0x278] sm:$0xff]
    %v377 = vld [vmem:[%s3 + $0x280] sm:$0xff]
    %v378 = vld [vmem:[%s3 + $0x288] sm:$0xff]
    %v379 = vld [vmem:[%s3 + $0x290] sm:$0xff]
    %v380 = vld [vmem:[%s3 + $0x298] sm:$0xff]
    %v381 = vld [vmem:[%s3 + $0x2a0] sm:$0xff]
    %v382 = vld [vmem:[%s3 + $0x2a8] sm:$0xff]
    %v383 = vld [vmem:[%s3 + $0x2b0] sm:$0xff]
    %v384 = vld [vmem:[%s3 + $0x2b8] sm:$0xff]
    %v385 = vld [vmem:[%s3 + $0x2c0] sm:$0xff]
    %v386 = vld [vmem:[%s3 + $0x2c8] sm:$0xff]
    %v387 = vld [vmem:[%s3 + $0x2d0] sm:$0xff]
    %v388 = vld [vmem:[%s3 + $0x2d8] sm:$0xff]
    %v389 = vld [vmem:[%s3 + $0x2e0] sm:$0xff]
    %v390 = vld [vmem:[%s3 + $0x2e8] sm:$0xff]
    %v391 = vld [vmem:[%s3 + $0x2f0] sm:$0xff]
    %v392 = vld [vmem:[%s3 + $0x2f8] sm:$0xff]
    %393 = vmatprep.subr.mxu0 %v298
    %394 = vmatpush1.msra.mxu0 %v297
    %395 = vmatprep.subr.mxu0 %v300
    %396 = vmatpush1.msra.mxu0 %v299
    %397 = vmatprep.subr.mxu0 %v302
    %398 = vmatpush1.msra.mxu0 %v301
    %399 = vmatprep.subr.mxu0 %v304
    %400 = vmatpush1.msra.mxu0 %v303
    %401 = vmatprep.subr.mxu0 %v306
    %402 = vmatpush1.msra.mxu0 %v305
    %403 = vmatprep.subr.mxu0 %v308
    %404 = vmatpush1.msra.mxu0 %v307
    %405 = vmatprep.subr.mxu0 %v310
    %406 = vmatpush1.msra.mxu0 %v309
    %407 = vmatprep.subr.mxu0 %v312
    %408 = vmatpush1.msra.mxu0 %v311
    %409 = vmatprep.subr.mxu0 %v314
    %410 = vmatpush1.msra.mxu0 %v313
    %411 = vmatprep.subr.mxu0 %v316
    %412 = vmatpush1.msra.mxu0 %v315
    %413 = vmatprep.subr.mxu0 %v318
    %414 = vmatpush1.msra.mxu0 %v317
    %415 = vmatprep.subr.mxu0 %v320
    %416 = vmatpush1.msra.mxu0 %v319
    %417 = vmatprep.subr.mxu0 %v322
    %418 = vmatpush1.msra.mxu0 %v321
    %419 = vmatprep.subr.mxu0 %v324
    %420 = vmatpush1.msra.mxu0 %v323
    %421 = vmatprep.subr.mxu0 %v326
    %422 = vmatpush1.msra.mxu0 %v325
    %423 = vmatprep.subr.mxu0 %v328
    %424 = vmatpush1.msra.mxu0 %v327
    %425 = vmatprep.subr.mxu0 %v330
    %426 = vmatpush1.msra.mxu0 %v329
    %427 = vmatprep.subr.mxu0 %v332
    %428 = vmatpush1.msra.mxu0 %v331
    %429 = vmatprep.subr.mxu0 %v334
    %430 = vmatpush1.msra.mxu0 %v333
    %431 = vmatprep.subr.mxu0 %v336
    %432 = vmatpush1.msra.mxu0 %v335
    %433 = vmatprep.subr.mxu0 %v338
    %434 = vmatpush1.msra.mxu0 %v337
    %435 = vmatprep.subr.mxu0 %v340
    %436 = vmatpush1.msra.mxu0 %v339
    %437 = vmatprep.subr.mxu0 %v342
    %438 = vmatpush1.msra.mxu0 %v341
    %439 = vmatprep.subr.mxu0 %v344
    %440 = vmatpush1.msra.mxu0 %v343
    %441 = vmatprep.subr.mxu0 %v346
    %442 = vmatpush1.msra.mxu0 %v345
    %443 = vmatprep.subr.mxu0 %v348
    %444 = vmatpush1.msra.mxu0 %v347
    %445 = vmatprep.subr.mxu0 %v350
    %446 = vmatpush1.msra.mxu0 %v349
    %447 = vmatprep.subr.mxu0 %v352
    %448 = vmatpush1.msra.mxu0 %v351
    %449 = vmatprep.subr.mxu0 %v354
    %450 = vmatpush1.msra.mxu0 %v353
    %451 = vmatprep.subr.mxu0 %v356
    %452 = vmatpush1.msra.mxu0 %v355
    %453 = vmatprep.subr.mxu0 %v358
    %454 = vmatpush1.msra.mxu0 %v357
    %455 = vmatprep.subr.mxu0 %v360
    %456 = vmatpush1.msra.mxu0 %v359
    %457 = vmatprep.mubr.f32.mxu0 %v39
    %458 = vmatmul.mubr.f32.gmra.mrb[0].mxu0 %v38
    %v459 = vpop.f32.mrb[0].mxu0
    %v460 = vadd.f32 0.0, %v459
    %v461 = vpop.f32.mrb[0].mxu0
    %v462 = vadd.f32 0.0, %v461
    %463 = vmatprep.mubr.f32.mxu0 %v42
    %464 = vmatmul.mubr.f32.gmra.mrb[0].mxu0 %v41
    %v465 = vpop.f32.mrb[0].mxu0
    %v466 = vadd.f32 0.0, %v465
    %v467 = vpop.f32.mrb[0].mxu0
    %v468 = vadd.f32 0.0, %v467
    %469 = vdwg.mxu0
    %470 = vmatprep.subr.mxu0 %v362
    %471 = vmatpush1.msra.mxu0 %v361
    %472 = vmatprep.subr.mxu0 %v364
    %473 = vmatpush1.msra.mxu0 %v363
    %474 = vmatprep.subr.mxu0 %v366
    %475 = vmatpush1.msra.mxu0 %v365
    %476 = vmatprep.subr.mxu0 %v368
    %477 = vmatpush1.msra.mxu0 %v367
    %478 = vmatprep.subr.mxu0 %v370
    %479 = vmatpush1.msra.mxu0 %v369
    %480 = vmatprep.subr.mxu0 %v372
    %481 = vmatpush1.msra.mxu0 %v371
    %482 = vmatprep.subr.mxu0 %v374
    %483 = vmatpush1.msra.mxu0 %v373
    %484 = vmatprep.subr.mxu0 %v376
    %485 = vmatpush1.msra.mxu0 %v375
    %486 = vmatprep.subr.mxu0 %v378
    %487 = vmatpush1.msra.mxu0 %v377
    %488 = vmatprep.subr.mxu0 %v380
    %489 = vmatpush1.msra.mxu0 %v379
    %490 = vmatprep.subr.mxu0 %v382
    %491 = vmatpush1.msra.mxu0 %v381
    %492 = vmatprep.subr.mxu0 %v384
    %493 = vmatpush1.msra.mxu0 %v383
    %494 = vmatprep.subr.mxu0 %v386
    %495 = vmatpush1.msra.mxu0 %v385
    %496 = vmatprep.subr.mxu0 %v388
    %497 = vmatpush1.msra.mxu0 %v387
    %498 = vmatprep.subr.mxu0 %v390
    %499 = vmatpush1.msra.mxu0 %v389
    %500 = vmatprep.subr.mxu0 %v392
    %501 = vmatpush1.msra.mxu0 %v391
    %502 = vmatprep.subr.mxu0 0.0
    %503 = vmatpush1.msra.mxu0 0.0
    %504 = vmatprep.subr.mxu0 0.0
    %505 = vmatpush1.msra.mxu0 0.0
    %506 = vmatprep.subr.mxu0 0.0
    %507 = vmatpush1.msra.mxu0 0.0
    %508 = vmatprep.subr.mxu0 0.0
    %509 = vmatpush1.msra.mxu0 0.0
    %510 = vmatprep.subr.mxu0 0.0
    %511 = vmatpush1.msra.mxu0 0.0
    %512 = vmatprep.subr.mxu0 0.0
    %513 = vmatpush1.msra.mxu0 0.0
    %514 = vmatprep.subr.mxu0 0.0
    %515 = vmatpush1.msra.mxu0 0.0
    %516 = vmatprep.subr.mxu0 0.0
    %517 = vmatpush1.msra.mxu0 0.0
    %518 = vmatprep.subr.mxu0 0.0
    %519 = vmatpush1.msra.mxu0 0.0
    %520 = vmatprep.subr.mxu0 0.0
    %521 = vmatpush1.msra.mxu0 0.0
    %522 = vmatprep.subr.mxu0 0.0
    %523 = vmatpush1.msra.mxu0 0.0
    %524 = vmatprep.subr.mxu0 0.0
    %525 = vmatpush1.msra.mxu0 0.0
    %526 = vmatprep.subr.mxu0 0.0
    %527 = vmatpush1.msra.mxu0 0.0
    %528 = vmatprep.subr.mxu0 0.0
    %529 = vmatpush1.msra.mxu0 0.0
    %530 = vmatprep.subr.mxu0 0.0
    %531 = vmatpush1.msra.mxu0 0.0
    %532 = vmatprep.subr.mxu0 0.0
    %533 = vmatpush1.msra.mxu0 0.0
    %534 = vmatprep.mubr.f32.mxu0 0.0
    %535 = vmatmul.mubr.f32.gmra.mrb[0].mxu0 %v40
    %v536 = vpop.f32.mrb[0].mxu0
    %v537 = vadd.f32 %v460, %v536
    %v538 = vpop.f32.mrb[0].mxu0
    %v539 = vadd.f32 %v462, %v538
    %540 = vmatprep.mubr.f32.mxu0 0.0
    %541 = vmatmul.mubr.f32.gmra.mrb[0].mxu0 %v43
    %v542 = vpop.f32.mrb[0].mxu0
    %v543 = vadd.f32 %v466, %v542
    %v544 = vpop.f32.mrb[0].mxu0
    %v545 = vadd.f32 %v468, %v544
    %546 = vdwg.mxu0
    %v547 = vld [vmem:[#allocation2] sm:$0xff]
    %v548 = vld [vmem:[#allocation2 + $0x8] sm:$0xff]
    %v549 = vsub.f32 %v287, %v543
    %v550 = vsub.f32 %v289, %v545
    %v551 = vadd.f32 %v547, %v549
    %v552 = vadd.f32 %v548, %v550
    %553 = vst [vmem:[#allocation2] sm:$0xff] %v551
    %554 = vst [vmem:[#allocation2 + $0x8] sm:$0xff] %v552
    %v555 = vld [vmem:[#allocation4] sm:$0xff]
    %v556 = vld [vmem:[#allocation4 + $0x8] sm:$0xff]
    %v557 = vsub.f32 %v537, %v293
    %v558 = vsub.f32 %v539, %v295
    %v559 = vadd.f32 %v555, %v557
    %v560 = vadd.f32 %v556, %v558
    %561 = vst [vmem:[#allocation4] sm:$0xff] %v559
    %562 = vst [vmem:[#allocation4 + $0x8] sm:$0xff] %v560
    // Predicated region
    $region22: #{backsub_pallas.1} parent=1 // pred_check
      _
    $region23: #{backsub_pallas.1} parent=1 // pred_check_branch
      %564 = sbr.rel (0) target = $region25
    $region24: #{backsub_pallas.1} parent=1 // pred_region
      %s566 = ssub.s32 256, 256
      %567 = vsyncadd [#allocation3], %s566
      %s569 = sshll.u32 [#allocation2], 4
      %s570 = int_to_ptr.vmem [resolvable:$true] %s569
      %572 = dma.vmem_to_hbm [thread:$0]  %s570, 256, %s4, [#allocation3]
    $region25: #{backsub_pallas.1} parent=1 // pred_fallthru
      _
    // Predicated region
    $region26: #{backsub_pallas.1} parent=1 // pred_check
      _
    $region27: #{backsub_pallas.1} parent=1 // pred_check_branch
      %574 = sbr.rel (0) target = $region29
    $region28: #{backsub_pallas.1} parent=1 // pred_region
      %s576 = ssub.s32 256, 256
      %577 = vsyncadd [#allocation5], %s576
      %s579 = sshll.u32 [#allocation4], 4
      %s580 = int_to_ptr.vmem [resolvable:$true] %s579
      %582 = dma.vmem_to_hbm [thread:$0]  %s580, 256, %s5, [#allocation5]
    $region29: #{backsub_pallas.1} parent=1 // pred_fallthru
      _
    // Predicated region
    $region30: #{backsub_pallas.1} parent=1 // pred_check
      _
    $region31: #{backsub_pallas.1} parent=1 // pred_check_branch
      %584 = sbr.rel (0) target = $region33
    $region32: #{backsub_pallas.1} parent=1 // pred_region
      %585 = dma.done [#allocation3], 256
    $region33: #{backsub_pallas.1} parent=1 // pred_fallthru
      _
    // Predicated region
    $region34: #{backsub_pallas.1} parent=1 // pred_check
      _
    $region35: #{backsub_pallas.1} parent=1 // pred_check_branch
      %587 = sbr.rel (0) target = $region37
    $region36: #{backsub_pallas.1} parent=1 // pred_region
      %588 = dma.done [#allocation5], 256
    $region37: #{backsub_pallas.1} parent=1 // pred_fallthru
      _
    %589 = vsyncpa [#allocation3], 1
    %590 = vsyncpa [#allocation5], 1

</llo_original>
